<compile_context>
chip_gen: v7x
topology: tpu7x:2x2x1
jax: 0.10.0
libtpu: 0.0.40
codegen_flags: <defaults>
</compile_context>

<pallas_src>
import jax
import jax.numpy as jnp
from jax.experimental import pallas as pl
from jax.experimental.pallas import tpu as pltpu


# ----------------------------- Pallas kernel ------------------------------ #
def _attn_gate_kernel(g_ref, x_ref, wg_ref, wx_ref, b_ref, wp_ref, bp_ref,
                      o_ref):
    # g_ref : (F_g, TN)    x_ref : (F_l, TN)  -- channels on sublanes, pixels on lanes
    # wg_ref: (F_int, F_g) wx_ref: (F_int, F_l)   BN-folded 1x1-conv weights (io dtype)
    # b_ref : (F_int, 1)   combined folded bias (bg + bx), f32
    # wp_ref: (F_int, 1) column  OR  (1, F_int) row (static choice), f32
    # bp_ref: SMEM (1,) f32 scalar
    # o_ref : (F_l, TN)
    g1 = jnp.dot(wg_ref[...], g_ref[...], preferred_element_type=jnp.float32)
    x1 = jnp.dot(wx_ref[...], x_ref[...], preferred_element_type=jnp.float32)
    p = jnp.maximum(g1 + x1 + b_ref[...], 0.0)                  # (F_int, TN), f32

    # psi projection.  Static choice made in the wrapper via wp's shape:
    #   * small F_int  -> column wp, sublane reduce on the XLU (idle slot)
    #   * large F_int  -> row wp, MXU dot (frees the VALU)
    if wp_ref.shape[0] == 1:
        logits = jnp.dot(wp_ref[...], p, preferred_element_type=jnp.float32)
    else:
        logits = jnp.sum(p * wp_ref[...], axis=0, keepdims=True)
    psi = jax.nn.sigmoid(logits + bp_ref[0])                    # (1, TN), f32

    if o_ref.dtype == jnp.float32:
        o_ref[...] = x_ref[...].astype(jnp.float32) * psi
    else:
        # Low-precision tail multiply (bf16 VPU on v6e/v7x; Mosaic widens on v5e).
        o_ref[...] = x_ref[...] * psi.astype(o_ref.dtype)


# ------------------------------ Tile sizing -------------------------------- #
def _pick_pixel_tile(hw, batch, f_g, f_l, f_int, itemsize, vmem_budget_bytes,
                     max_tile_lanes=4096, min_grid_steps=8):
    """Pixel-tile (lane dim) sized against a VMEM budget.

    Accounts for the double-buffered streamed blocks (g, x, out) *and* the
    in-kernel f32 temporaries (g1, p, psi, f32 output product).  Capped at
    `max_tile_lanes` and shrunk so the grid has >= `min_grid_steps` steps when
    the image is large enough (pipeline overlap; v7x TC sharding).
    """
    per_pixel = (2 * (f_g + 2 * f_l) * itemsize          # streamed, double-buffered
                 + (2 * f_int + f_l + 1) * 4)            # f32 in-tile temporaries
    tn = vmem_budget_bytes // max(per_pixel, 1)
    tn = min(tn, max_tile_lanes)
    tiles_wanted = max(1, -(-min_grid_steps // max(batch, 1)))   # ceil
    tn = min(tn, -(-hw // tiles_wanted))                          # ceil(hw / tiles)
    tn = max(128, (tn // 128) * 128)                              # lane-dense blocks
    if tn >= hw:
        return int(hw)                   # full image per block (legal: full dim)
    return int(tn)


def _vmem_limit_cap_bytes():
    """Generation-aware scoped-VMEM ceiling (~3/4 of physical capacity)."""
    try:
        phys = int(pltpu.get_tpu_info().vmem_capacity_bytes)
    except Exception:
        phys = 64 << 20                  # conservative default (v7x)
    return (phys * 3) // 4               # 48 MiB on v7x, 96 MiB on v5e/v6e


# ------------------------------ pallas_call -------------------------------- #
def attention_gate_nchw(g, x, wg, wx, b_gx, wp, bp, *,
                        vmem_budget_bytes=12 << 20):
    """g: (B, F_g, H, W), x: (B, F_l, H, W) NCHW.  Returns (B, F_l, H, W).

    Weights are BN-folded, channel-major:
      wg: (F_int, F_g), wx: (F_int, F_l)  in the activation dtype,
      b_gx: (F_int, 1) f32, wp: (F_int, 1) or (1, F_int) f32, bp: (1,) f32.
    """
    B, F_g, H, W = g.shape
    _, F_l, _, _ = x.shape
    F_int = wg.shape[0]
    HW = H * W

    # NCHW -> (B, C, H*W): free contiguous reshape, no transpose pass in HBM.
    g3 = g.reshape(B, F_g, HW)
    x3 = x.reshape(B, F_l, HW)

    itemsize = jnp.dtype(x.dtype).itemsize
    tn = _pick_pixel_tile(HW, B, F_g, F_l, F_int, itemsize, vmem_budget_bytes)
    grid = (B, pl.cdiv(HW, tn))   # no wrapper padding; Pallas masks the tail block
    # (tail blocks feed garbage lanes into sigmoid; harmless — stores are
    #  masked and there is no cross-pixel reduction)

    # Scoped-VMEM limit: streamed blocks + f32 temporaries + resident weights,
    # with 2x headroom, floored at 32 MiB and capped per generation.
    stream_bytes = 2 * (F_g + 2 * F_l) * tn * itemsize
    temp_bytes = (2 * F_int + F_l + 1) * tn * 4
    weight_bytes = 2 * (itemsize * F_int * (F_g + F_l) + 4 * (2 * F_int + 1))
    vmem_limit = int(min(max(2 * (stream_bytes + temp_bytes + weight_bytes),
                             32 << 20),
                         _vmem_limit_cap_bytes()))

    full = lambda b, j: (0, 0)    # weights/biases: same block every step
    out = pl.pallas_call(
        _attn_gate_kernel,
        out_shape=jax.ShapeDtypeStruct((B, F_l, HW), x.dtype),
        grid_spec=pltpu.PrefetchScalarGridSpec(
            num_scalar_prefetch=0,
            grid=grid,
            in_specs=[
                pl.BlockSpec((None, F_g, tn), lambda b, j: (b, 0, j)),   # g tile
                pl.BlockSpec((None, F_l, tn), lambda b, j: (b, 0, j)),   # x tile
                pl.BlockSpec((F_int, F_g), full),                        # Wg (folded)
                pl.BlockSpec((F_int, F_l), full),                        # Wx (folded)
                pl.BlockSpec((F_int, 1), full),                          # bg + bx
                pl.BlockSpec(wp.shape, full),                            # Wpsi (folded)
                pl.BlockSpec(memory_space=pltpu.MemorySpace.SMEM),       # bpsi scalar
            ],
            out_specs=pl.BlockSpec((None, F_l, tn), lambda b, j: (b, 0, j)),
        ),
        compiler_params=pltpu.CompilerParams(
            dimension_semantics=("parallel", "parallel"),   # shards across TCs (v7x)
            vmem_limit_bytes=vmem_limit),
    )(g3, x3, wg, wx, b_gx, wp, bp)
    return out.reshape(B, F_l, H, W)


# --------------------------- Parameter handling ---------------------------- #
def fold_conv_bn(w, b, gamma, beta, mean, var, eps=1e-5):
    """Fold inference-mode BatchNorm into a 1x1 conv (math in f32).

    w: (C_out, C_in), b: (C_out,).  Returns (w_folded, b_folded) in f32.
    """
    w = w.astype(jnp.float32)
    b = b.astype(jnp.float32)
    gamma = gamma.astype(jnp.float32)
    beta = beta.astype(jnp.float32)
    mean = mean.astype(jnp.float32)
    var = var.astype(jnp.float32)
    scale = gamma / jnp.sqrt(var + eps)             # (C_out,)
    return w * scale[:, None], (b - mean) * scale + beta


def init_params(key, F_g, F_l, F_int, dtype=jnp.float32):
    """Deterministic synthetic parameters (conv weights/biases + BN params)."""
    ks = jax.random.split(key, 6)
    wg = jax.random.normal(ks[0], (F_int, F_g), dtype) * 0.1
    bg = jax.random.normal(ks[1], (F_int,), dtype) * 0.1
    wx = jax.random.normal(ks[2], (F_int, F_l), dtype) * 0.1
    bx = jax.random.normal(ks[3], (F_int,), dtype) * 0.1
    wp = jax.random.normal(ks[4], (1, F_int), dtype) * 0.1
    bp = jax.random.normal(ks[5], (1,), dtype) * 0.1
    # BatchNorm at PyTorch-init values (gamma=1, beta=0, mean=0, var=1).
    bn = lambda c: (jnp.ones((c,), dtype), jnp.zeros((c,), dtype),
                    jnp.zeros((c,), dtype), jnp.ones((c,), dtype))
    return dict(wg=wg, bg=bg, bn_g=bn(F_int),
                wx=wx, bx=bx, bn_x=bn(F_int),
                wp=wp, bp=bp, bn_p=bn(1))


# ------------------------------ Module wrapper ----------------------------- #
def global_attention_l1(g, x, params, *, vmem_budget_bytes=12 << 20):
    """g: (B, F_g, H, W), x: (B, F_l, H, W) NCHW (PyTorch convention).

    Streaming dtype follows the inputs (cast g/x to bf16 at the caller for the
    ~2x HBM-bandwidth win; accumulation and psi stay f32 in-kernel).
    """
    F_int = params["wg"].shape[0]

    # Fold inference-mode BN into the 1x1 convs (f32 math).
    wg, bg = fold_conv_bn(params["wg"], params["bg"], *params["bn_g"])
    wx, bx = fold_conv_bn(params["wx"], params["bx"], *params["bn_x"])
    wp, bp = fold_conv_bn(params["wp"], params["bp"], *params["bn_p"])

    b_gx = (bg + bx).reshape(F_int, 1).astype(jnp.float32)   # single fused bias add
    # psi weight layout: column -> XLU sublane reduce (small F_int),
    #                    row    -> MXU dot (large F_int, frees the VALU).
    if F_int >= 64:
        wp_arr = wp.reshape(1, F_int).astype(jnp.float32)
    else:
        wp_arr = wp.reshape(F_int, 1).astype(jnp.float32)
    bp_s = bp.reshape(1).astype(jnp.float32)                 # SMEM scalar

    act_dtype = x.dtype   # bf16 branch weights run the MXU at full rate
    return attention_gate_nchw(g, x,
                               wg.astype(act_dtype), wx.astype(act_dtype),
                               b_gx, wp_arr, bp_s,
                               vmem_budget_bytes=vmem_budget_bytes)


# Pure-JAX reference for correctness checking (all math in f32).
def reference(g, x, params, weight_dtype=None):
    wg, bg = fold_conv_bn(params["wg"], params["bg"], *params["bn_g"])
    wx, bx = fold_conv_bn(params["wx"], params["bx"], *params["bn_x"])
    wp, bp = fold_conv_bn(params["wp"], params["bp"], *params["bn_p"])
    if weight_dtype is not None:   # mimic the kernel's weight-dtype rounding
        wg = wg.astype(weight_dtype).astype(jnp.float32)
        wx = wx.astype(weight_dtype).astype(jnp.float32)
    gf = g.astype(jnp.float32)
    xf = x.astype(jnp.float32)
    g1 = jnp.einsum("oc,bchw->bohw", wg, gf) + bg[None, :, None, None]
    x1 = jnp.einsum("oc,bchw->bohw", wx, xf) + bx[None, :, None, None]
    p = jnp.maximum(g1 + x1, 0.0)
    psi = jax.nn.sigmoid(
        jnp.einsum("oc,bchw->bohw", wp, p) + bp[None, :, None, None])
    return xf * psi


if __name__ == "__main__":
    key = jax.random.PRNGKey(0)
    k_g, k_x, k_p = jax.random.split(key, 3)

    B, F_g, F_l, F_int = 2, 4, 4, 8
    params = init_params(k_p, F_g, F_l, F_int)

    # --- Test 1: f32, 16x16 image (pixel dim a multiple of 128) ------------ #
    H = W = 16
    g = jax.random.normal(k_g, (B, F_g, H, W), jnp.float32)
    x = jax.random.normal(k_x, (B, F_l, H, W), jnp.float32)
    out = jax.block_until_ready(global_attention_l1(g, x, params))
    ref = jax.block_until_ready(reference(g, x, params))
    assert out.shape == (B, F_l, H, W)
    assert jnp.allclose(out, ref, atol=1e-5, rtol=1e-5), "f32 16x16 mismatch"

    # --- Test 2: f32, 20x20 image (HW=400 -> masked tail pixel block) ------ #
    H2 = W2 = 20
    g2 = jax.random.normal(jax.random.fold_in(k_g, 1), (B, F_g, H2, W2), jnp.float32)
    x2 = jax.random.normal(jax.random.fold_in(k_x, 1), (B, F_l, H2, W2), jnp.float32)
    out2 = jax.block_until_ready(global_attention_l1(g2, x2, params))
    ref2 = jax.block_until_ready(reference(g2, x2, params))
    assert out2.shape == (B, F_l, H2, W2)
    assert jnp.allclose(out2, ref2, atol=1e-5, rtol=1e-5), "f32 tail-block mismatch"

    # --- Test 3: bf16 streaming (bf16 weights/tail, f32 accumulation) ------ #
    g_bf = g.astype(jnp.bfloat16)
    x_bf = x.astype(jnp.bfloat16)
    out_bf = jax.block_until_ready(global_attention_l1(g_bf, x_bf, params))
    ref_bf = jax.block_until_ready(
        reference(g_bf, x_bf, params, weight_dtype=jnp.bfloat16))
    assert out_bf.dtype == jnp.bfloat16
    assert jnp.allclose(out_bf.astype(jnp.float32), ref_bf,
                        atol=3e-2, rtol=3e-2), "bf16 mismatch"

    print("KERNEL_OK")
</pallas_src>

<mosaic_0001>
module attributes {stable_mosaic.version = 11 : i64} {
  func.func @_attn_gate_kernel(%arg0: i32, %arg1: i32, %arg2: memref<1x4x128xf32, #tpu.memory_space<vmem>>, %arg3: memref<1x4x128xf32, #tpu.memory_space<vmem>>, %arg4: memref<8x4xf32, #tpu.memory_space<vmem>>, %arg5: memref<8x4xf32, #tpu.memory_space<vmem>>, %arg6: memref<8x1xf32, #tpu.memory_space<vmem>>, %arg7: memref<8x1xf32, #tpu.memory_space<vmem>>, %arg8: memref<1xf32, #tpu.memory_space<smem>>, %arg9: memref<1x4x128xf32, #tpu.memory_space<vmem>>) attributes {dimension_semantics = [#tpu.dimension_semantics<parallel>, #tpu.dimension_semantics<parallel>], iteration_bounds = array<i64: 2, 2>, scalar_prefetch = 0 : i64, scratch_operands = 0 : i64, tpu.core_type = #tpu.core_type<tc>, window_params = [{transform_indices = @transform_0, window_bounds = array<i64: 1, 4, 128>}, {transform_indices = @transform_1, window_bounds = array<i64: 1, 4, 128>}, {pipeline_mode = #tpu.pipeline_mode<synchronous>, transform_indices = @transform_2, window_bounds = array<i64: 8, 4>}, {pipeline_mode = #tpu.pipeline_mode<synchronous>, transform_indices = @transform_3, window_bounds = array<i64: 8, 4>}, {pipeline_mode = #tpu.pipeline_mode<synchronous>, transform_indices = @transform_4, window_bounds = array<i64: 8, 1>}, {pipeline_mode = #tpu.pipeline_mode<synchronous>, transform_indices = @transform_5, window_bounds = array<i64: 8, 1>}, {transform_indices = @transform_6, window_bounds = array<i64: 1>}, {transform_indices = @transform_7, window_bounds = array<i64: 1, 4, 128>}]} {
    %c0 = arith.constant 0 : index
    %c0_0 = arith.constant 0 : index
    %0 = vector.load %arg4[%c0, %c0_0] : memref<8x4xf32, #tpu.memory_space<vmem>>, vector<8x4xf32>
    %c0_1 = arith.constant 0 : index
    %c0_2 = arith.constant 0 : index
    %c0_3 = arith.constant 0 : index
    %1 = vector.load %arg2[%c0_1, %c0_2, %c0_3] : memref<1x4x128xf32, #tpu.memory_space<vmem>>, vector<1x4x128xf32>
    %2 = vector.shape_cast %1 : vector<1x4x128xf32> to vector<4x128xf32>
    %cst = arith.constant dense<0.000000e+00> : vector<8x128xf32>
    %3 = tpu.matmul %0, %2, %cst {dimension_numbers = #tpu.dot_dimension_numbers<[1], [0], [0], [1], [0, 0, 1, 1], [], []>} : vector<8x4xf32>, vector<4x128xf32>, vector<8x128xf32> -> vector<8x128xf32>
    %c0_4 = arith.constant 0 : index
    %c0_5 = arith.constant 0 : index
    %4 = vector.load %arg5[%c0_4, %c0_5] : memref<8x4xf32, #tpu.memory_space<vmem>>, vector<8x4xf32>
    %c0_6 = arith.constant 0 : index
    %c0_7 = arith.constant 0 : index
    %c0_8 = arith.constant 0 : index
    %5 = vector.load %arg3[%c0_6, %c0_7, %c0_8] : memref<1x4x128xf32, #tpu.memory_space<vmem>>, vector<1x4x128xf32>
    %6 = vector.shape_cast %5 : vector<1x4x128xf32> to vector<4x128xf32>
    %cst_9 = arith.constant dense<0.000000e+00> : vector<8x128xf32>
    %7 = tpu.matmul %4, %6, %cst_9 {dimension_numbers = #tpu.dot_dimension_numbers<[1], [0], [0], [1], [0, 0, 1, 1], [], []>} : vector<8x4xf32>, vector<4x128xf32>, vector<8x128xf32> -> vector<8x128xf32>
    %8 = arith.addf %3, %7 : vector<8x128xf32>
    %c0_10 = arith.constant 0 : index
    %c0_11 = arith.constant 0 : index
    %9 = vector.load %arg6[%c0_10, %c0_11] : memref<8x1xf32, #tpu.memory_space<vmem>>, vector<8x1xf32>
    %10 = vector.broadcast %9 : vector<8x1xf32> to vector<8x128xf32>
    %11 = arith.addf %8, %10 : vector<8x128xf32>
    %cst_12 = arith.constant 0.000000e+00 : f32
    %12 = vector.broadcast %cst_12 : f32 to vector<8x128xf32>
    %13 = arith.maximumf %11, %12 : vector<8x128xf32>
    %c0_13 = arith.constant 0 : index
    %c0_14 = arith.constant 0 : index
    %14 = vector.load %arg7[%c0_13, %c0_14] : memref<8x1xf32, #tpu.memory_space<vmem>>, vector<8x1xf32>
    %15 = vector.broadcast %14 : vector<8x1xf32> to vector<8x128xf32>
    %16 = arith.mulf %13, %15 : vector<8x128xf32>
    %cst_15 = arith.constant dense<0.000000e+00> : vector<128xf32>
    %17 = vector.multi_reduction <add>, %16, %cst_15 [0] : vector<8x128xf32> to vector<128xf32>
    %18 = vector.shape_cast %17 : vector<128xf32> to vector<1x128xf32>
    %c0_16 = arith.constant 0 : index
    %19 = memref.load %arg8[%c0_16] : memref<1xf32, #tpu.memory_space<smem>>
    %20 = vector.broadcast %19 : f32 to vector<1x128xf32>
    %21 = arith.addf %18, %20 : vector<1x128xf32>
    %22 = arith.negf %21 : vector<1x128xf32>
    %23 = math.exp %22 : vector<1x128xf32>
    %cst_17 = arith.constant 1.000000e+00 : f32
    %24 = vector.broadcast %cst_17 : f32 to vector<1x128xf32>
    %25 = arith.addf %24, %23 : vector<1x128xf32>
    %26 = arith.divf %24, %25 : vector<1x128xf32>
    %c0_18 = arith.constant 0 : index
    %c0_19 = arith.constant 0 : index
    %c0_20 = arith.constant 0 : index
    %27 = vector.load %arg3[%c0_18, %c0_19, %c0_20] : memref<1x4x128xf32, #tpu.memory_space<vmem>>, vector<1x4x128xf32>
    %28 = vector.shape_cast %27 : vector<1x4x128xf32> to vector<4x128xf32>
    %29 = vector.broadcast %26 : vector<1x128xf32> to vector<4x128xf32>
    %30 = arith.mulf %28, %29 : vector<4x128xf32>
    %c0_21 = arith.constant 0 : index
    %c0_22 = arith.constant 0 : index
    %c0_23 = arith.constant 0 : index
    %31 = vector.load %arg9[%c0_21, %c0_22, %c0_23] : memref<1x4x128xf32, #tpu.memory_space<vmem>>, vector<1x4x128xf32>
    %32 = vector.shape_cast %31 : vector<1x4x128xf32> to vector<4x128xf32>
    %33 = vector.shape_cast %30 : vector<4x128xf32> to vector<1x4x128xf32>
    tpu.vector_store %arg9[%c0_21, %c0_22, %c0_23], %33 {strides = array<i32>} : memref<1x4x128xf32, #tpu.memory_space<vmem>>, vector<1x4x128xf32>,
    return
  }
  func.func @transform_0(%arg0: i32, %arg1: i32) -> (i32, i32, i32) {
    %c0_i32 = arith.constant 0 : i32
    %c0_i32_0 = arith.constant 0 : i32
    return %arg0, %c0_i32, %arg1 : i32, i32, i32
  }
  func.func @transform_1(%arg0: i32, %arg1: i32) -> (i32, i32, i32) {
    %c0_i32 = arith.constant 0 : i32
    %c0_i32_0 = arith.constant 0 : i32
    return %arg0, %c0_i32, %arg1 : i32, i32, i32
  }
  func.func @transform_2(%arg0: i32, %arg1: i32) -> (i32, i32) {
    %c0_i32 = arith.constant 0 : i32
    %c0_i32_0 = arith.constant 0 : i32
    %c0_i32_1 = arith.constant 0 : i32
    return %c0_i32, %c0_i32_0 : i32, i32
  }
  func.func @transform_3(%arg0: i32, %arg1: i32) -> (i32, i32) {
    %c0_i32 = arith.constant 0 : i32
    %c0_i32_0 = arith.constant 0 : i32
    %c0_i32_1 = arith.constant 0 : i32
    return %c0_i32, %c0_i32_0 : i32, i32
  }
  func.func @transform_4(%arg0: i32, %arg1: i32) -> (i32, i32) {
    %c0_i32 = arith.constant 0 : i32
    %c0_i32_0 = arith.constant 0 : i32
    %c0_i32_1 = arith.constant 0 : i32
    return %c0_i32, %c0_i32_0 : i32, i32
  }
  func.func @transform_5(%arg0: i32, %arg1: i32) -> (i32, i32) {
    %c0_i32 = arith.constant 0 : i32
    %c0_i32_0 = arith.constant 0 : i32
    %c0_i32_1 = arith.constant 0 : i32
    return %c0_i32, %c0_i32_0 : i32, i32
  }
  func.func @transform_6(%arg0: i32, %arg1: i32) -> i32 {
    %c0_i32 = arith.constant 0 : i32
    %c0_i32_0 = arith.constant 0 : i32
    return %c0_i32 : i32
  }
  func.func @transform_7(%arg0: i32, %arg1: i32) -> (i32, i32, i32) {
    %c0_i32 = arith.constant 0 : i32
    %c0_i32_0 = arith.constant 0 : i32
    return %arg0, %c0_i32, %arg1 : i32, i32, i32
  }
}

</mosaic_0001>

<llo_original>
// kernel: tpu_custom_call.1
$region0: #{tpu_custom_call.1}
  #allocation0 [shape = 'u32[]', space=smem, size = 0x4, offset = 0x4, fixed_abs, tag = 'smem constant byte address 0x4 - core index']
  #allocation1 [shape = 'u32[144,128]{1,0:T(1,128)}', space=vmem, size = 0x12000, scoped, tag = 'internal scratch']
  #allocation2 [shape = 'f32[1]{0:T(128)S(6)}', space=smem, size = 0x200, scoped, tag = 'scoped memory for tpu_custom_call.1']
  %s0 = inlined_call_operand.vmem [shape: f32[2,4,256], index: 0, kind: input, shape index: {}]
  %s1 = inlined_call_operand.vmem [shape: f32[2,4,256], index: 1, kind: input, shape index: {}]
  %s2 = inlined_call_operand.vmem [shape: f32[8,4], index: 2, kind: input, shape index: {}]
  %s3 = inlined_call_operand.vmem [shape: f32[8,4], index: 3, kind: input, shape index: {}]
  %s4 = inlined_call_operand.vmem [shape: f32[8,1], index: 4, kind: input, shape index: {}]
  %s5 = inlined_call_operand.vmem [shape: f32[8,1], index: 5, kind: input, shape index: {}]
  %s6 = inlined_call_operand.<no memory space> [shape: f32[1], index: 6, kind: input, shape index: {}]
  %s7 = inlined_call_operand.hbm [shape: f32[2,4,256], index: 7, kind: output, shape index: {}]
  %s8 = sld [smem:[#allocation0]]
  $region61: #{tpu_custom_call.1} parent=0
    _
  %s10 = ssub.s32 1, %s8
  %s11 = scalar_select 0, %s10, %s8
  %12 = sst [smem:[#allocation2]] %s6
  $region1: #{tpu_custom_call.1} parent=0
    #allocation3 [shape = 'u8[4096]{0}', space=vmem, size = 0x1000, scoped, tag = 'output window, operand 0']
    #allocation4 [shape = 's32[2]{0}', space=sflag, size = 0x8, scoped, tag = 'scoped memory for tpu_custom_call.1']
    %13 = vsyncpa [#allocation4], 0
    %s14 = scalar_lea.sflag [#allocation4], 1
    %15 = vsyncpa %s14, 0
    loop: start=0, step=1, limit=6
    $region2: #{tpu_custom_call.1} parent=1 // loop_pre_header
      _
    $region3: #{tpu_custom_call.1} parent=1 // loop_header
      %s17 = sphi 0, %s21
      %p18 = scmp.ge.s32.totalorder %s17, 6
      %s24 = sphi 0, %s36
      %s25 = sphi 0, %s32
      %s26 = sphi 0, %s24
      %s27 = sphi 0, %s25
      %s28 = sphi 0, %s26
      %s29 = sphi 0, %s27
      %s41 = sphi 0, %s43
      %s44 = sphi 0, %s41
      %s45 = sphi 0, %s44
      %s61 = sphi 0, %s45
      %s69 = sphi 0, %s71
      %s72 = sphi 0, %s69
      %s73 = sphi 0, %s72
      %s89 = sphi 0, %s73
      %s93 = sphi 0, %s93
      %s95 = sphi 0, %s93
      %s96 = sphi 0, %s95
      %s110 = sphi 0, %s96
      %s114 = sphi 0, %s114
      %s116 = sphi 0, %s114
      %s117 = sphi 0, %s116
      %s131 = sphi 0, %s117
      %s135 = sphi 0, %s135
      %s137 = sphi 0, %s135
      %s138 = sphi 0, %s137
      %s152 = sphi 0, %s138
      %s156 = sphi 0, %s156
      %s158 = sphi 0, %s156
      %s159 = sphi 0, %s158
      %s173 = sphi 0, %s159
      %s177 = sphi 0, %s177
      %s179 = sphi 0, %s177
      %s180 = sphi 0, %s179
      %s194 = sphi 0, %s180
      %s202 = sphi 0, %s204
      %s205 = sphi 0, %s202
      %s206 = sphi 0, %s205
      %s222 = sphi 0, %s206
    $region4: #{tpu_custom_call.1} parent=1 // loop_header_branch
      %20 = sbr.rel (%p18) target = $region8
    $region5: #{tpu_custom_call.1} parent=1 // loop_body
      %s22 = ssub.s32 %s17, 1
      %s23 = ssub.s32 %s17, 2
      %s30 = sadd.s32 1, %s25
      %p31 = scmp.ge.s32.totalorder %s30, 2
      %s32 = scalar_select %p31, 0, %s30
      %s33 = sadd.s32 1, %s24
      %s34 = scalar_select %p31, %s33, %s24
      %p35 = scmp.ge.s32.totalorder %s34, 2
      %s36 = scalar_select %p35, 0, %s34
      %s37 = ssub.s32 %s24, %s36
      %s38 = ssub.s32 %s25, %s32
      %s39 = sor.u32 %s37, %s38
      %p40 = scmp.eq.s32.totalorder %s39, 0
      %s42 = sadd.s32 %s41, 1
      %s43 = scalar_select %p40, %s41, %s42
      %p46 = pneg %p40
      %p47 = scmp.eq.s32.totalorder %s17, 3
      %p48 = por %p46, %p47
      %p49 = scmp.ne.s32.totalorder %s41, %s44
      %p50 = scmp.eq.s32.totalorder %s17, 0
      %p51 = por %p49, %p50
      %p52 = scmp.ne.s32.totalorder %s41, %s44
      %p53 = scmp.eq.s32.totalorder %s22, 3
      %p54 = por %p52, %p53
      %p55 = scmp.ne.s32.totalorder %s44, %s45
      %p56 = scmp.eq.s32.totalorder %s22, 0
      %p57 = por %p55, %p56
      %p58 = scmp.ne.s32.totalorder %s44, %s45
      %p59 = scmp.eq.s32.totalorder %s23, 3
      %p60 = por %p58, %p59
      %p62 = scmp.ne.s32.totalorder %s45, %s61
      %p63 = scmp.eq.s32.totalorder %s23, 0
      %p64 = por %p62, %p63
      %s65 = ssub.s32 %s24, %s36
      %s66 = ssub.s32 %s25, %s32
      %s67 = sor.u32 %s65, %s66
      %p68 = scmp.eq.s32.totalorder %s67, 0
      %s70 = sadd.s32 %s69, 1
      %s71 = scalar_select %p68, %s69, %s70
      %p74 = pneg %p68
      %p75 = scmp.eq.s32.totalorder %s17, 3
      %p76 = por %p74, %p75
      %p77 = scmp.ne.s32.totalorder %s69, %s72
      %p78 = scmp.eq.s32.totalorder %s17, 0
      %p79 = por %p77, %p78
      %p80 = scmp.ne.s32.totalorder %s69, %s72
      %p81 = scmp.eq.s32.totalorder %s22, 3
      %p82 = por %p80, %p81
      %p83 = scmp.ne.s32.totalorder %s72, %s73
      %p84 = scmp.eq.s32.totalorder %s22, 0
      %p85 = por %p83, %p84
      %p86 = scmp.ne.s32.totalorder %s72, %s73
      %p87 = scmp.eq.s32.totalorder %s23, 3
      %p88 = por %p86, %p87
      %p90 = scmp.ne.s32.totalorder %s73, %s89
      %p91 = scmp.eq.s32.totalorder %s23, 0
      %p92 = por %p90, %p91
      %s94 = sadd.s32 %s93, 1
      %p97 = scmp.eq.s32.totalorder %s17, 3
      %p98 = scmp.ne.s32.totalorder %s93, %s95
      %p99 = scmp.eq.s32.totalorder %s17, 0
      %p100 = por %p98, %p99
      %p101 = scmp.ne.s32.totalorder %s93, %s95
      %p102 = scmp.eq.s32.totalorder %s22, 3
      %p103 = por %p101, %p102
      %p104 = scmp.ne.s32.totalorder %s95, %s96
      %p105 = scmp.eq.s32.totalorder %s22, 0
      %p106 = por %p104, %p105
      %p107 = scmp.ne.s32.totalorder %s95, %s96
      %p108 = scmp.eq.s32.totalorder %s23, 3
      %p109 = por %p107, %p108
      %p111 = scmp.ne.s32.totalorder %s96, %s110
      %p112 = scmp.eq.s32.totalorder %s23, 0
      %p113 = por %p111, %p112
      %s115 = sadd.s32 %s114, 1
      %p118 = scmp.eq.s32.totalorder %s17, 3
      %p119 = scmp.ne.s32.totalorder %s114, %s116
      %p120 = scmp.eq.s32.totalorder %s17, 0
      %p121 = por %p119, %p120
      %p122 = scmp.ne.s32.totalorder %s114, %s116
      %p123 = scmp.eq.s32.totalorder %s22, 3
      %p124 = por %p122, %p123
      %p125 = scmp.ne.s32.totalorder %s116, %s117
      %p126 = scmp.eq.s32.totalorder %s22, 0
      %p127 = por %p125, %p126
      %p128 = scmp.ne.s32.totalorder %s116, %s117
      %p129 = scmp.eq.s32.totalorder %s23, 3
      %p130 = por %p128, %p129
      %p132 = scmp.ne.s32.totalorder %s117, %s131
      %p133 = scmp.eq.s32.totalorder %s23, 0
      %p134 = por %p132, %p133
      %s136 = sadd.s32 %s135, 1
      %p139 = scmp.eq.s32.totalorder %s17, 3
      %p140 = scmp.ne.s32.totalorder %s135, %s137
      %p141 = scmp.eq.s32.totalorder %s17, 0
      %p142 = por %p140, %p141
      %p143 = scmp.ne.s32.totalorder %s135, %s137
      %p144 = scmp.eq.s32.totalorder %s22, 3
      %p145 = por %p143, %p144
      %p146 = scmp.ne.s32.totalorder %s137, %s138
      %p147 = scmp.eq.s32.totalorder %s22, 0
      %p148 = por %p146, %p147
      %p149 = scmp.ne.s32.totalorder %s137, %s138
      %p150 = scmp.eq.s32.totalorder %s23, 3
      %p151 = por %p149, %p150
      %p153 = scmp.ne.s32.totalorder %s138, %s152
      %p154 = scmp.eq.s32.totalorder %s23, 0
      %p155 = por %p153, %p154
      %s157 = sadd.s32 %s156, 1
      %p160 = scmp.eq.s32.totalorder %s17, 3
      %p161 = scmp.ne.s32.totalorder %s156, %s158
      %p162 = scmp.eq.s32.totalorder %s17, 0
      %p163 = por %p161, %p162
      %p164 = scmp.ne.s32.totalorder %s156, %s158
      %p165 = scmp.eq.s32.totalorder %s22, 3
      %p166 = por %p164, %p165
      %p167 = scmp.ne.s32.totalorder %s158, %s159
      %p168 = scmp.eq.s32.totalorder %s22, 0
      %p169 = por %p167, %p168
      %p170 = scmp.ne.s32.totalorder %s158, %s159
      %p171 = scmp.eq.s32.totalorder %s23, 3
      %p172 = por %p170, %p171
      %p174 = scmp.ne.s32.totalorder %s159, %s173
      %p175 = scmp.eq.s32.totalorder %s23, 0
      %p176 = por %p174, %p175
      %s178 = sadd.s32 %s177, 1
      %p181 = scmp.eq.s32.totalorder %s17, 3
      %p182 = scmp.ne.s32.totalorder %s177, %s179
      %p183 = scmp.eq.s32.totalorder %s17, 0
      %p184 = por %p182, %p183
      %p185 = scmp.ne.s32.totalorder %s177, %s179
      %p186 = scmp.eq.s32.totalorder %s22, 3
      %p187 = por %p185, %p186
      %p188 = scmp.ne.s32.totalorder %s179, %s180
      %p189 = scmp.eq.s32.totalorder %s22, 0
      %p190 = por %p188, %p189
      %p191 = scmp.ne.s32.totalorder %s179, %s180
      %p192 = scmp.eq.s32.totalorder %s23, 3
      %p193 = por %p191, %p192
      %p195 = scmp.ne.s32.totalorder %s180, %s194
      %p196 = scmp.eq.s32.totalorder %s23, 0
      %p197 = por %p195, %p196
      %s198 = ssub.s32 %s24, %s36
      %s199 = ssub.s32 %s25, %s32
      %s200 = sor.u32 %s198, %s199
      %p201 = scmp.eq.s32.totalorder %s200, 0
      %s203 = sadd.s32 %s202, 1
      %s204 = scalar_select %p201, %s202, %s203
      %p207 = pneg %p201
      %p208 = scmp.eq.s32.totalorder %s17, 3
      %p209 = por %p207, %p208
      %p210 = scmp.ne.s32.totalorder %s202, %s205
      %p211 = scmp.eq.s32.totalorder %s17, 0
      %p212 = por %p210, %p211
      %p213 = scmp.ne.s32.totalorder %s202, %s205
      %p214 = scmp.eq.s32.totalorder %s22, 3
      %p215 = por %p213, %p214
      %p216 = scmp.ne.s32.totalorder %s205, %s206
      %p217 = scmp.eq.s32.totalorder %s22, 0
      %p218 = por %p216, %p217
      %p219 = scmp.ne.s32.totalorder %s205, %s206
      %p220 = scmp.eq.s32.totalorder %s23, 3
      %p221 = por %p219, %p220
      %p223 = scmp.ne.s32.totalorder %s206, %s222
      %p224 = scmp.eq.s32.totalorder %s23, 0
      %p225 = por %p223, %p224
      %p226 = scmp.le.s32.totalorder 1, %s17
      %p227 = scmp.lt.s32.totalorder %s17, 5
      %p228 = pnand %p226, %p227
      %p229 = pneg %p228
      // Predicated region
      $region9: #{tpu_custom_call.1} parent=5 // pred_check
        _
      $region10: #{tpu_custom_call.1} parent=5 // pred_check_branch
        %231 = sbr.rel (%p228) target = $region12
      $region11: #{tpu_custom_call.1} parent=5 // pred_region
        %s232 = ssub.s32 %s17, 1
        // Predicated region
        $region13: #{tpu_custom_call.1} parent=11 // pred_check
          %p233 = pneg %p106
        $region14: #{tpu_custom_call.1} parent=11 // pred_check_branch
          %235 = sbr.rel (%p233) target = $region16
        $region15: #{tpu_custom_call.1} parent=11 // pred_region
          _
        $region16: #{tpu_custom_call.1} parent=11 // pred_fallthru
          _
        // Predicated region
        $region17: #{tpu_custom_call.1} parent=11 // pred_check
          %p236 = pneg %p127
        $region18: #{tpu_custom_call.1} parent=11 // pred_check_branch
          %238 = sbr.rel (%p236) target = $region20
        $region19: #{tpu_custom_call.1} parent=11 // pred_region
          _
        $region20: #{tpu_custom_call.1} parent=11 // pred_fallthru
          _
        // Predicated region
        $region21: #{tpu_custom_call.1} parent=11 // pred_check
          %p239 = pneg %p148
        $region22: #{tpu_custom_call.1} parent=11 // pred_check_branch
          %241 = sbr.rel (%p239) target = $region24
        $region23: #{tpu_custom_call.1} parent=11 // pred_region
          _
        $region24: #{tpu_custom_call.1} parent=11 // pred_fallthru
          _
        // Predicated region
        $region25: #{tpu_custom_call.1} parent=11 // pred_check
          %p242 = pneg %p169
        $region26: #{tpu_custom_call.1} parent=11 // pred_check_branch
          %244 = sbr.rel (%p242) target = $region28
        $region27: #{tpu_custom_call.1} parent=11 // pred_region
          _
        $region28: #{tpu_custom_call.1} parent=11 // pred_fallthru
          _
        // Predicated region
        $region29: #{tpu_custom_call.1} parent=11 // pred_check
          %p245 = pneg %p190
        $region30: #{tpu_custom_call.1} parent=11 // pred_check_branch
          %247 = sbr.rel (%p245) target = $region32
        $region31: #{tpu_custom_call.1} parent=11 // pred_region
          _
        $region32: #{tpu_custom_call.1} parent=11 // pred_fallthru
          _
      $region12: #{tpu_custom_call.1} parent=5 // pred_fallthru
        _
      %p248 = scmp.lt.s32.totalorder %s17, 4
      // Predicated region
      $region33: #{tpu_custom_call.1} parent=5 // pred_check
        %p249 = pneg %p248
      $region34: #{tpu_custom_call.1} parent=5 // pred_check_branch
        %251 = sbr.rel (%p249) target = $region36
      $region35: #{tpu_custom_call.1} parent=5 // pred_region
        // Predicated region
        $region37: #{tpu_custom_call.1} parent=35 // pred_check
          %p252 = pneg %p51
        $region38: #{tpu_custom_call.1} parent=35 // pred_check_branch
          %254 = sbr.rel (%p252) target = $region40
        $region39: #{tpu_custom_call.1} parent=35 // pred_region
          %p255 = scmp.lt.s32.totalorder %s24, 1
          %s256 = scalar_select %p255, %s24, 1
          %p257 = scmp.lt.s32.totalorder %s25, 1
          %s258 = scalar_select %p257, %s25, 1
          %s259 = smul.addr %s256, 2
          %s260 = sadd.s32 %s258, %s259
          %s261 = smul.addr %s260, 4
          %s262 = scalar_lea.vmem %s0, %s261
        $region40: #{tpu_custom_call.1} parent=35 // pred_fallthru
          _
        // Predicated region
        $region41: #{tpu_custom_call.1} parent=35 // pred_check
          %p263 = pneg %p79
        $region42: #{tpu_custom_call.1} parent=35 // pred_check_branch
          %265 = sbr.rel (%p263) target = $region44
        $region43: #{tpu_custom_call.1} parent=35 // pred_region
          %p266 = scmp.lt.s32.totalorder %s24, 1
          %s267 = scalar_select %p266, %s24, 1
          %p268 = scmp.lt.s32.totalorder %s25, 1
          %s269 = scalar_select %p268, %s25, 1
          %s270 = smul.addr %s267, 2
          %s271 = sadd.s32 %s269, %s270
          %s272 = smul.addr %s271, 4
          %s273 = scalar_lea.vmem %s1, %s272
        $region44: #{tpu_custom_call.1} parent=35 // pred_fallthru
          _
      $region36: #{tpu_custom_call.1} parent=5 // pred_fallthru
        _
      %p274 = scmp.le.s32.totalorder 1, %s17
      %p275 = scmp.lt.s32.totalorder %s17, 5
      %p276 = pnand %p274, %p275
      %p277 = pneg %p276
      // Predicated region
      $region45: #{tpu_custom_call.1} parent=5 // pred_check
        _
      $region46: #{tpu_custom_call.1} parent=5 // pred_check_branch
        %279 = sbr.rel (%p276) target = $region48
      $region47: #{tpu_custom_call.1} parent=5 // pred_region
        %s280 = ssub.s32 %s17, 1
        %p281 = scmp.lt.s32.totalorder %s26, 1
        %s282 = scalar_select %p281, %s26, 1
        %p283 = scmp.lt.s32.totalorder %s27, 1
        %s284 = scalar_select %p283, %s27, 1
        %s285 = smul.addr %s282, 2
        %s286 = sadd.s32 %s284, %s285
        %s287 = smul.addr %s286, 4
        %s288 = scalar_lea.vmem %s0, %s287
        %p289 = pneg %p57
        %p290 = pneg %p54
        %p291 = scmp.lt.s32.totalorder %s26, 1
        %s292 = scalar_select %p291, %s26, 1
        %p293 = scmp.lt.s32.totalorder %s27, 1
        %s294 = scalar_select %p293, %s27, 1
        %s295 = smul.addr %s292, 2
        %s296 = sadd.s32 %s294, %s295
        %s297 = smul.addr %s296, 4
        %s298 = scalar_lea.vmem %s1, %s297
        %p299 = pneg %p85
        %p300 = pneg %p82
        %p301 = pneg %p106
        %p302 = pneg %p103
        %p303 = pneg %p127
        %p304 = pneg %p124
        %p305 = pneg %p148
        %p306 = pneg %p145
        %p307 = pneg %p169
        %p308 = pneg %p166
        %p309 = pneg %p190
        %p310 = pneg %p187
        %p311 = pneg %p218
        %p312 = pneg %p215
        %s313 = sand.u32 %s205, 1
        %s314 = scalar_lea.sflag [#allocation4], %s313
        %s315 = sand.u32 %s205, 1
        %s316 = smul.addr %s315, 4
        %s317 = scalar_lea.vmem [#allocation3], %s316
        %p318 = scmp.lt.s32.totalorder %s26, 1
        %s319 = scalar_select %p318, %s26, 1
        %p320 = scmp.lt.s32.totalorder %s27, 1
        %s321 = scalar_select %p320, %s27, 1
        %s322 = smul.addr %s319, 2
        %s323 = sadd.s32 %s321, %s322
        %s324 = smul.addr %s323, 4
        %s325 = scalar_lea.vmem %s0, %s324
        %p326 = scmp.lt.s32.totalorder %s26, 1
        %s327 = scalar_select %p326, %s26, 1
        %p328 = scmp.lt.s32.totalorder %s27, 1
        %s329 = scalar_select %p328, %s27, 1
        %s330 = smul.addr %s327, 2
        %s331 = sadd.s32 %s329, %s330
        %s332 = smul.addr %s331, 4
        %s333 = scalar_lea.vmem %s1, %s332
        %v334 = vld [vmem:[%s2] sm:$0xff]
        %v335 = vld [vmem:[%s325] sm:$0xf]
        %v336 = vld [vmem:[%s3] sm:$0xff]
        %v337 = vld [vmem:[%s333] sm:$0xf]
        %vm338 = vcmask 31744
        %v340 = vsel %vm338, %v336, 0
        %vm342 = vcmask 1043456
        %v344 = vsel %vm342, %v337, 0
        %346 = vmatprep.subr.mxu0 0.0
        %347 = vmatpush1.msra.mxu0 %v344
        %348 = vmatprep.subr.mxu0 0.0
        %349 = vmatpush1.msra.mxu0 0.0
        %350 = vmatprep.subr.mxu0 0.0
        %351 = vmatpush1.msra.mxu0 0.0
        %352 = vmatprep.subr.mxu0 0.0
        %353 = vmatpush1.msra.mxu0 0.0
        %354 = vmatprep.subr.mxu0 0.0
        %355 = vmatpush1.msra.mxu0 0.0
        %356 = vmatprep.subr.mxu0 0.0
        %357 = vmatpush1.msra.mxu0 0.0
        %358 = vmatprep.subr.mxu0 0.0
        %359 = vmatpush1.msra.mxu0 0.0
        %360 = vmatprep.subr.mxu0 0.0
        %361 = vmatpush1.msra.mxu0 0.0
        %362 = vmatprep.subr.mxu0 0.0
        %363 = vmatpush1.msra.mxu0 0.0
        %364 = vmatprep.subr.mxu0 0.0
        %365 = vmatpush1.msra.mxu0 0.0
        %366 = vmatprep.subr.mxu0 0.0
        %367 = vmatpush1.msra.mxu0 0.0
        %368 = vmatprep.subr.mxu0 0.0
        %369 = vmatpush1.msra.mxu0 0.0
        %370 = vmatprep.subr.mxu0 0.0
        %371 = vmatpush1.msra.mxu0 0.0
        %372 = vmatprep.subr.mxu0 0.0
        %373 = vmatpush1.msra.mxu0 0.0
        %374 = vmatprep.subr.mxu0 0.0
        %375 = vmatpush1.msra.mxu0 0.0
        %376 = vmatprep.subr.mxu0 0.0
        %377 = vmatpush1.msra.mxu0 0.0
        %378 = vmatprep.subr.mxu0 0.0
        %379 = vmatpush1.msra.mxu0 0.0
        %380 = vmatprep.subr.mxu0 0.0
        %381 = vmatpush1.msra.mxu0 0.0
        %382 = vmatprep.subr.mxu0 0.0
        %383 = vmatpush1.msra.mxu0 0.0
        %384 = vmatprep.subr.mxu0 0.0
        %385 = vmatpush1.msra.mxu0 0.0
        %386 = vmatprep.subr.mxu0 0.0
        %387 = vmatpush1.msra.mxu0 0.0
        %388 = vmatprep.subr.mxu0 0.0
        %389 = vmatpush1.msra.mxu0 0.0
        %390 = vmatprep.subr.mxu0 0.0
        %391 = vmatpush1.msra.mxu0 0.0
        %392 = vmatprep.subr.mxu0 0.0
        %393 = vmatpush1.msra.mxu0 0.0
        %394 = vmatprep.subr.mxu0 0.0
        %395 = vmatpush1.msra.mxu0 0.0
        %396 = vmatprep.subr.mxu0 0.0
        %397 = vmatpush1.msra.mxu0 0.0
        %398 = vmatprep.subr.mxu0 0.0
        %399 = vmatpush1.msra.mxu0 0.0
        %400 = vmatprep.subr.mxu0 0.0
        %401 = vmatpush1.msra.mxu0 0.0
        %402 = vmatprep.subr.mxu0 0.0
        %403 = vmatpush1.msra.mxu0 0.0
        %404 = vmatprep.subr.mxu0 0.0
        %405 = vmatpush1.msra.mxu0 0.0
        %406 = vmatprep.subr.mxu0 0.0
        %407 = vmatpush1.msra.mxu0 0.0
        %408 = vmatprep.subr.mxu0 0.0
        %409 = vmatpush1.msra.mxu0 0.0
        %410 = vmatprep.mubr.f32.mxu0 0.0
        %411 = vmatmul.mubr.f32.gmra.mrb[0].mxu0 %v340
        %v412 = vpop.f32.mrb[0].mxu0
        %v413 = vadd.f32 0.0, %v412
        %v414 = vpop.f32.mrb[0].mxu0
        %415 = vdwg.mxu0
        %v417 = vsel %vm338, %v334, 0
        %v420 = vsel %vm342, %v335, 0
        %422 = vmatprep.subr.mxu0 0.0
        %423 = vmatpush1.msra.mxu0 %v420
        %424 = vmatprep.subr.mxu0 0.0
        %425 = vmatpush1.msra.mxu0 0.0
        %426 = vmatprep.subr.mxu0 0.0
        %427 = vmatpush1.msra.mxu0 0.0
        %428 = vmatprep.subr.mxu0 0.0
        %429 = vmatpush1.msra.mxu0 0.0
        %430 = vmatprep.subr.mxu0 0.0
        %431 = vmatpush1.msra.mxu0 0.0
        %432 = vmatprep.subr.mxu0 0.0
        %433 = vmatpush1.msra.mxu0 0.0
        %434 = vmatprep.subr.mxu0 0.0
        %435 = vmatpush1.msra.mxu0 0.0
        %436 = vmatprep.subr.mxu0 0.0
        %437 = vmatpush1.msra.mxu0 0.0
        %438 = vmatprep.subr.mxu0 0.0
        %439 = vmatpush1.msra.mxu0 0.0
        %440 = vmatprep.subr.mxu0 0.0
        %441 = vmatpush1.msra.mxu0 0.0
        %442 = vmatprep.subr.mxu0 0.0
        %443 = vmatpush1.msra.mxu0 0.0
        %444 = vmatprep.subr.mxu0 0.0
        %445 = vmatpush1.msra.mxu0 0.0
        %446 = vmatprep.subr.mxu0 0.0
        %447 = vmatpush1.msra.mxu0 0.0
        %448 = vmatprep.subr.mxu0 0.0
        %449 = vmatpush1.msra.mxu0 0.0
        %450 = vmatprep.subr.mxu0 0.0
        %451 = vmatpush1.msra.mxu0 0.0
        %452 = vmatprep.subr.mxu0 0.0
        %453 = vmatpush1.msra.mxu0 0.0
        %454 = vmatprep.subr.mxu0 0.0
        %455 = vmatpush1.msra.mxu0 0.0
        %456 = vmatprep.subr.mxu0 0.0
        %457 = vmatpush1.msra.mxu0 0.0
        %458 = vmatprep.subr.mxu0 0.0
        %459 = vmatpush1.msra.mxu0 0.0
        %460 = vmatprep.subr.mxu0 0.0
        %461 = vmatpush1.msra.mxu0 0.0
        %462 = vmatprep.subr.mxu0 0.0
        %463 = vmatpush1.msra.mxu0 0.0
        %464 = vmatprep.subr.mxu0 0.0
        %465 = vmatpush1.msra.mxu0 0.0
        %466 = vmatprep.subr.mxu0 0.0
        %467 = vmatpush1.msra.mxu0 0.0
        %468 = vmatprep.subr.mxu0 0.0
        %469 = vmatpush1.msra.mxu0 0.0
        %470 = vmatprep.subr.mxu0 0.0
        %471 = vmatpush1.msra.mxu0 0.0
        %472 = vmatprep.subr.mxu0 0.0
        %473 = vmatpush1.msra.mxu0 0.0
        %474 = vmatprep.subr.mxu0 0.0
        %475 = vmatpush1.msra.mxu0 0.0
        %476 = vmatprep.subr.mxu0 0.0
        %477 = vmatpush1.msra.mxu0 0.0
        %478 = vmatprep.subr.mxu0 0.0
        %479 = vmatpush1.msra.mxu0 0.0
        %480 = vmatprep.subr.mxu0 0.0
        %481 = vmatpush1.msra.mxu0 0.0
        %482 = vmatprep.subr.mxu0 0.0
        %483 = vmatpush1.msra.mxu0 0.0
        %484 = vmatprep.subr.mxu0 0.0
        %485 = vmatpush1.msra.mxu0 0.0
        %486 = vmatprep.mubr.f32.mxu0 0.0
        %487 = vmatmul.mubr.f32.gmra.mrb[0].mxu0 %v417
        %v488 = vpop.f32.mrb[0].mxu0
        %v489 = vadd.f32 %v413, %v488
        %v490 = vpop.f32.mrb[0].mxu0
        %491 = vdwg.mxu0
        %v492 = vld [vmem:[%s4] sm:$0xff]
        %494 = vset.pattern.permute.xlu0 0
        %495 = vperm.xlu0 %494, %v492
        %v496 = vpop.permute.xlu0 %495
        %v498 = vadd.f32 %v489, %v496
        %v499 = vmax.f32 %v498, 0.0
        %v500 = vld [vmem:[%s5] sm:$0xff]
        %502 = vset.pattern.permute.xlu0 0
        %503 = vperm.xlu0 %502, %v500
        %v504 = vpop.permute.xlu0 %503
        %v506 = vmul.f32 %v499, %v504
        %v507 = vrot.slane %v506, 4
        %v508 = vadd.f32 %v506, %v507
        %v509 = vrot.slane %v508, 2
        %v510 = vadd.f32 %v508, %v509
        %v511 = vrot.slane %v510, 1
        %v512 = vadd.f32 %v510, %v511
        %s513 = sld [smem:[#allocation2]]
        %v514 = vstv %s513
        %v515 = vadd.f32 %v512, %v514
        %v516 = vxor.u32 %v515, 2147483648
        %v517 = vmul.f32 %v516, 1.442695
        %v518 = vpow.pop %v517
        %v519 = vadd.f32 %v518, 1.0
        %v520 = vrcp.pop %v519
        %v521 = vmul.f32 1.0, %v520
        %v522 = vmul.f32 %v337, %v521
        %523 = vst [vmem:[%s317] sm:$0xf] %v522
        %s524 = sand.u32 %s205, 1
        %s525 = scalar_lea.sflag [#allocation4], %s524
        %s526 = sand.u32 %s205, 1
        %s527 = smul.addr %s526, 4
        %s528 = scalar_lea.vmem [#allocation3], %s527
        // Predicated region
        $region49: #{tpu_custom_call.1} parent=47 // pred_check
          %p529 = pneg %p215
        $region50: #{tpu_custom_call.1} parent=47 // pred_check_branch
          %531 = sbr.rel (%p529) target = $region52
        $region51: #{tpu_custom_call.1} parent=47 // pred_region
          %s533 = ssub.s32 64, 64
          %534 = vsyncadd %s525, %s533
          %s535 = smul.addr %s26, 2
          %s536 = sadd.s32 %s27, %s535
          %s537 = smul.addr %s536, 64
          %s538 = scalar_lea.hbm %s7, %s537
          %s540 = sshll.u32 %s528, 4
          %s541 = int_to_ptr.vmem [resolvable:$true] %s540
          %543 = dma.vmem_to_hbm [thread:$0]  %s541, 64, %s538, %s525
        $region52: #{tpu_custom_call.1} parent=47 // pred_fallthru
          _
      $region48: #{tpu_custom_call.1} parent=5 // pred_fallthru
        _
      %p544 = scmp.le.s32.totalorder 2, %s17
      // Predicated region
      $region53: #{tpu_custom_call.1} parent=5 // pred_check
        %p545 = pneg %p544
      $region54: #{tpu_custom_call.1} parent=5 // pred_check_branch
        %547 = sbr.rel (%p545) target = $region56
      $region55: #{tpu_custom_call.1} parent=5 // pred_region
        %s548 = ssub.s32 %s17, 2
        // Predicated region
        $region57: #{tpu_custom_call.1} parent=55 // pred_check
          %p549 = pneg %p221
        $region58: #{tpu_custom_call.1} parent=55 // pred_check_branch
          %551 = sbr.rel (%p549) target = $region60
        $region59: #{tpu_custom_call.1} parent=55 // pred_region
          %s552 = sand.u32 %s206, 1
          %s553 = scalar_lea.sflag [#allocation4], %s552
          %s554 = sand.u32 %s206, 1
          %s555 = smul.addr %s554, 4
          %s556 = scalar_lea.vmem [#allocation3], %s555
          %557 = dma.done %s553, 64
        $region60: #{tpu_custom_call.1} parent=55 // pred_fallthru
          _
      $region56: #{tpu_custom_call.1} parent=5 // pred_fallthru
        _
    $region6: #{tpu_custom_call.1} parent=1 // loop_footer
      %s21 = sadd.s32 1, %s17
    $region7: #{tpu_custom_call.1} parent=1 // loop_footer_branch
      %16 = sbr.rel target = $region3
    $region8: #{tpu_custom_call.1} parent=1 // loop_exit
      _
    %558 = vsyncpa [#allocation4], 1
    %s559 = scalar_lea.sflag [#allocation4], 1
    %560 = vsyncpa %s559, 1

</llo_original>
